<compile_context>
chip_gen: v7x
topology: tpu7x:2x2x1
jax: 0.10.0
libtpu: 0.0.40
codegen_flags: <defaults>
</compile_context>

<pallas_src>
import jax
import jax.numpy as jnp
from jax.experimental import pallas as pl
from jax.experimental.pallas import tpu as pltpu


def mlp_kernel(x_ref, w1_ref, b1_ref, w2_ref, b2_ref, w3_ref, b3_ref, o_ref):
    # x_ref: (in_f, TB) -- batch on the lane axis (lane-dense).
    xT = x_ref[...]                                                    # (4, TB)

    # fc1 + ReLU : (8,4) @ (4,TB) -> (8,TB)
    h1 = jnp.dot(w1_ref[...], xT, preferred_element_type=jnp.float32) + b1_ref[...]
    h1 = jnp.maximum(h1, 0.0)

    # fc2 + ReLU : (9,8) @ (8,TB) -> (9,TB)
    h2 = jnp.dot(w2_ref[...], h1, preferred_element_type=jnp.float32) + b2_ref[...]
    h2 = jnp.maximum(h2, 0.0)

    # out        : (3,9) @ (9,TB) -> (3,TB)
    y = jnp.dot(w3_ref[...], h2, preferred_element_type=jnp.float32) + b3_ref[...]
    o_ref[...] = y.astype(o_ref.dtype)


def mlp_forward(x, params, tile_b=2048):
    """x: (B, in_features) f32. params: PyTorch-layout weights (out,in), biases (out,1)."""
    w1, b1 = params["w1"], params["b1"]
    w2, b2 = params["w2"], params["b2"]
    w3, b3 = params["w3"], params["b3"]

    B, in_f = x.shape
    h1_f, h2_f, out_f = w1.shape[0], w2.shape[0], w3.shape[0]

    # Batch tile: multiple of 128 (lane width), capped by tile_b.
    tile = min(int(tile_b), max(128, ((B + 127) // 128) * 128))
    tile = max(128, (tile // 128) * 128)
    Bp = ((B + tile - 1) // tile) * tile
    grid = (Bp // tile,)

    # Host-side transpose (+ zero-pad batch up to a tile multiple so every
    # grid step works on a full, deterministic block).
    xT = jnp.transpose(x)                                              # (in_f, B)
    if Bp != B:
        xT = jnp.pad(xT, ((0, 0), (0, Bp - B)))

    # Per-step VMEM budget: double-buffered x/y tiles + activations + weights.
    io_bytes = 2 * 2 * tile * (in_f + out_f) * 4        # x & y tiles, 2 buffers each
    act_bytes = 2 * tile * (h1_f + h2_f) * 4            # h1/h2 intermediates
    w_bytes = 4 * (w1.size + b1.size + w2.size + b2.size + w3.size + b3.size)
    vmem_limit = int(io_bytes + act_bytes + w_bytes + (8 << 20))       # + headroom

    x_spec = pl.BlockSpec((in_f, tile), lambda i: (0, i))
    o_spec = pl.BlockSpec((out_f, tile), lambda i: (0, i))

    def full(shape):  # weights/biases: full array, resident across all grid steps
        return pl.BlockSpec(shape, lambda i: (0, 0))

    yT = pl.pallas_call(
        mlp_kernel,
        out_shape=jax.ShapeDtypeStruct((out_f, Bp), jnp.float32),
        grid=grid,
        in_specs=[
            x_spec,
            full(w1.shape), full(b1.shape),
            full(w2.shape), full(b2.shape),
            full(w3.shape), full(b3.shape),
        ],
        out_specs=o_spec,
        compiler_params=pltpu.CompilerParams(
            dimension_semantics=("parallel",),
            vmem_limit_bytes=vmem_limit,
        ),
    )(xT, w1, b1, w2, b2, w3, b3)

    # Back to PyTorch convention (B, out_features), dropping batch padding.
    return jnp.transpose(yT[:, :B])


def init_params(key, in_features=4, h1=8, h2=9, out_features=3):
    """nn.Linear-style init; weights stored (out, in), biases stored (out, 1)."""
    ks = jax.random.split(key, 6)

    def uniform_linear(kw, kb, fan_in, fan_out):
        bound = 1.0 / jnp.sqrt(jnp.float32(fan_in))
        w = jax.random.uniform(kw, (fan_out, fan_in), jnp.float32, -bound, bound)
        b = jax.random.uniform(kb, (fan_out, 1), jnp.float32, -bound, bound)
        return w, b

    w1, b1 = uniform_linear(ks[0], ks[1], in_features, h1)
    w2, b2 = uniform_linear(ks[2], ks[3], h1, h2)
    w3, b3 = uniform_linear(ks[4], ks[5], h2, out_features)
    return {"w1": w1, "b1": b1, "w2": w2, "b2": b2, "w3": w3, "b3": b3}


def mlp_reference(x, params):
    """Pure-JAX reference of the same forward pass (PyTorch layout weights)."""
    h = jnp.maximum(x @ params["w1"].T + params["b1"].T, 0.0)
    h = jnp.maximum(h @ params["w2"].T + params["b2"].T, 0.0)
    return h @ params["w3"].T + params["b3"].T


if __name__ == "__main__":
    key = jax.random.PRNGKey(0)
    k_x, k_p = jax.random.split(key)

    # Module-consistent shapes: (batch, in_features=4).  Batch is a
    # non-multiple of the tile to exercise padding + a multi-step grid.
    batch, in_features = 1000, 4
    x = jax.random.normal(k_x, (batch, in_features), jnp.float32)
    params = init_params(k_p, in_features=in_features, h1=8, h2=9, out_features=3)

    y = mlp_forward(x, params, tile_b=256)   # grid of 4 batch tiles
    y = jax.block_until_ready(y)

    y_ref = mlp_reference(x, params)
    assert y.shape == (batch, 3)
    assert jnp.allclose(y, y_ref, atol=1e-5, rtol=1e-5)

    print("KERNEL_OK")
</pallas_src>

<mosaic_0001>
module attributes {stable_mosaic.version = 11 : i64} {
  func.func @mlp_kernel(%arg0: i32, %arg1: memref<4x256xf32, #tpu.memory_space<vmem>>, %arg2: memref<8x4xf32, #tpu.memory_space<vmem>>, %arg3: memref<8x1xf32, #tpu.memory_space<vmem>>, %arg4: memref<9x8xf32, #tpu.memory_space<vmem>>, %arg5: memref<9x1xf32, #tpu.memory_space<vmem>>, %arg6: memref<3x9xf32, #tpu.memory_space<vmem>>, %arg7: memref<3x1xf32, #tpu.memory_space<vmem>>, %arg8: memref<3x256xf32, #tpu.memory_space<vmem>>) attributes {dimension_semantics = [#tpu.dimension_semantics<parallel>], iteration_bounds = array<i64: 4>, scalar_prefetch = 0 : i64, scratch_operands = 0 : i64, tpu.core_type = #tpu.core_type<tc>, window_params = [{transform_indices = @transform_0, window_bounds = array<i64: 4, 256>}, {pipeline_mode = #tpu.pipeline_mode<synchronous>, transform_indices = @transform_1, window_bounds = array<i64: 8, 4>}, {pipeline_mode = #tpu.pipeline_mode<synchronous>, transform_indices = @transform_2, window_bounds = array<i64: 8, 1>}, {pipeline_mode = #tpu.pipeline_mode<synchronous>, transform_indices = @transform_3, window_bounds = array<i64: 9, 8>}, {pipeline_mode = #tpu.pipeline_mode<synchronous>, transform_indices = @transform_4, window_bounds = array<i64: 9, 1>}, {pipeline_mode = #tpu.pipeline_mode<synchronous>, transform_indices = @transform_5, window_bounds = array<i64: 3, 9>}, {pipeline_mode = #tpu.pipeline_mode<synchronous>, transform_indices = @transform_6, window_bounds = array<i64: 3, 1>}, {transform_indices = @transform_7, window_bounds = array<i64: 3, 256>}]} {
    %c0 = arith.constant 0 : index
    %c0_0 = arith.constant 0 : index
    %0 = vector.load %arg1[%c0, %c0_0] : memref<4x256xf32, #tpu.memory_space<vmem>>, vector<4x256xf32>
    %c0_1 = arith.constant 0 : index
    %c0_2 = arith.constant 0 : index
    %1 = vector.load %arg2[%c0_1, %c0_2] : memref<8x4xf32, #tpu.memory_space<vmem>>, vector<8x4xf32>
    %cst = arith.constant dense<0.000000e+00> : vector<8x256xf32>
    %2 = tpu.matmul %1, %0, %cst {dimension_numbers = #tpu.dot_dimension_numbers<[1], [0], [0], [1], [0, 0, 1, 1], [], []>} : vector<8x4xf32>, vector<4x256xf32>, vector<8x256xf32> -> vector<8x256xf32>
    %c0_3 = arith.constant 0 : index
    %c0_4 = arith.constant 0 : index
    %3 = vector.load %arg3[%c0_3, %c0_4] : memref<8x1xf32, #tpu.memory_space<vmem>>, vector<8x1xf32>
    %4 = vector.broadcast %3 : vector<8x1xf32> to vector<8x256xf32>
    %5 = arith.addf %2, %4 : vector<8x256xf32>
    %cst_5 = arith.constant 0.000000e+00 : f32
    %6 = vector.broadcast %cst_5 : f32 to vector<8x256xf32>
    %7 = arith.maximumf %5, %6 : vector<8x256xf32>
    %c0_6 = arith.constant 0 : index
    %c0_7 = arith.constant 0 : index
    %8 = vector.load %arg4[%c0_6, %c0_7] : memref<9x8xf32, #tpu.memory_space<vmem>>, vector<9x8xf32>
    %cst_8 = arith.constant dense<0.000000e+00> : vector<9x256xf32>
    %9 = tpu.matmul %8, %7, %cst_8 {dimension_numbers = #tpu.dot_dimension_numbers<[1], [0], [0], [1], [0, 0, 1, 1], [], []>} : vector<9x8xf32>, vector<8x256xf32>, vector<9x256xf32> -> vector<9x256xf32>
    %c0_9 = arith.constant 0 : index
    %c0_10 = arith.constant 0 : index
    %10 = vector.load %arg5[%c0_9, %c0_10] : memref<9x1xf32, #tpu.memory_space<vmem>>, vector<9x1xf32>
    %11 = vector.broadcast %10 : vector<9x1xf32> to vector<9x256xf32>
    %12 = arith.addf %9, %11 : vector<9x256xf32>
    %cst_11 = arith.constant 0.000000e+00 : f32
    %13 = vector.broadcast %cst_11 : f32 to vector<9x256xf32>
    %14 = arith.maximumf %12, %13 : vector<9x256xf32>
    %c0_12 = arith.constant 0 : index
    %c0_13 = arith.constant 0 : index
    %15 = vector.load %arg6[%c0_12, %c0_13] : memref<3x9xf32, #tpu.memory_space<vmem>>, vector<3x9xf32>
    %cst_14 = arith.constant dense<0.000000e+00> : vector<3x256xf32>
    %16 = tpu.matmul %15, %14, %cst_14 {dimension_numbers = #tpu.dot_dimension_numbers<[1], [0], [0], [1], [0, 0, 1, 1], [], []>} : vector<3x9xf32>, vector<9x256xf32>, vector<3x256xf32> -> vector<3x256xf32>
    %c0_15 = arith.constant 0 : index
    %c0_16 = arith.constant 0 : index
    %17 = vector.load %arg7[%c0_15, %c0_16] : memref<3x1xf32, #tpu.memory_space<vmem>>, vector<3x1xf32>
    %18 = vector.broadcast %17 : vector<3x1xf32> to vector<3x256xf32>
    %19 = arith.addf %16, %18 : vector<3x256xf32>
    %c0_17 = arith.constant 0 : index
    %c0_18 = arith.constant 0 : index
    %20 = vector.load %arg8[%c0_17, %c0_18] : memref<3x256xf32, #tpu.memory_space<vmem>>, vector<3x256xf32>
    tpu.vector_store %arg8[%c0_17, %c0_18], %19 {strides = array<i32>} : memref<3x256xf32, #tpu.memory_space<vmem>>, vector<3x256xf32>,
    return
  }
  func.func @transform_0(%arg0: i32) -> (i32, i32) {
    %c0_i32 = arith.constant 0 : i32
    %c0_i32_0 = arith.constant 0 : i32
    return %c0_i32, %arg0 : i32, i32
  }
  func.func @transform_1(%arg0: i32) -> (i32, i32) {
    %c0_i32 = arith.constant 0 : i32
    %c0_i32_0 = arith.constant 0 : i32
    %c0_i32_1 = arith.constant 0 : i32
    return %c0_i32, %c0_i32_0 : i32, i32
  }
  func.func @transform_2(%arg0: i32) -> (i32, i32) {
    %c0_i32 = arith.constant 0 : i32
    %c0_i32_0 = arith.constant 0 : i32
    %c0_i32_1 = arith.constant 0 : i32
    return %c0_i32, %c0_i32_0 : i32, i32
  }
  func.func @transform_3(%arg0: i32) -> (i32, i32) {
    %c0_i32 = arith.constant 0 : i32
    %c0_i32_0 = arith.constant 0 : i32
    %c0_i32_1 = arith.constant 0 : i32
    return %c0_i32, %c0_i32_0 : i32, i32
  }
  func.func @transform_4(%arg0: i32) -> (i32, i32) {
    %c0_i32 = arith.constant 0 : i32
    %c0_i32_0 = arith.constant 0 : i32
    %c0_i32_1 = arith.constant 0 : i32
    return %c0_i32, %c0_i32_0 : i32, i32
  }
  func.func @transform_5(%arg0: i32) -> (i32, i32) {
    %c0_i32 = arith.constant 0 : i32
    %c0_i32_0 = arith.constant 0 : i32
    %c0_i32_1 = arith.constant 0 : i32
    return %c0_i32, %c0_i32_0 : i32, i32
  }
  func.func @transform_6(%arg0: i32) -> (i32, i32) {
    %c0_i32 = arith.constant 0 : i32
    %c0_i32_0 = arith.constant 0 : i32
    %c0_i32_1 = arith.constant 0 : i32
    return %c0_i32, %c0_i32_0 : i32, i32
  }
  func.func @transform_7(%arg0: i32) -> (i32, i32) {
    %c0_i32 = arith.constant 0 : i32
    %c0_i32_0 = arith.constant 0 : i32
    return %c0_i32, %arg0 : i32, i32
  }
}

</mosaic_0001>

<llo_original>
// kernel: tpu_custom_call.1
$region0: #{tpu_custom_call.1}
  #allocation0 [shape = 'u32[]', space=smem, size = 0x4, offset = 0x4, fixed_abs, tag = 'smem constant byte address 0x4 - core index']
  #allocation1 [shape = 'u32[144,128]{1,0:T(1,128)}', space=vmem, size = 0x12000, scoped, tag = 'internal scratch']
  %s0 = inlined_call_operand.vmem [shape: f32[4,1024], index: 0, kind: input, shape index: {}]
  %s1 = inlined_call_operand.vmem [shape: f32[8,4], index: 1, kind: input, shape index: {}]
  %s2 = inlined_call_operand.vmem [shape: f32[8,1], index: 2, kind: input, shape index: {}]
  %s3 = inlined_call_operand.vmem [shape: f32[9,8], index: 3, kind: input, shape index: {}]
  %s4 = inlined_call_operand.vmem [shape: f32[9,1], index: 4, kind: input, shape index: {}]
  %s5 = inlined_call_operand.vmem [shape: f32[3,9], index: 5, kind: input, shape index: {}]
  %s6 = inlined_call_operand.vmem [shape: f32[3,1], index: 6, kind: input, shape index: {}]
  %s7 = inlined_call_operand.hbm [shape: f32[3,1024], index: 7, kind: output, shape index: {}]
  %s8 = sld [smem:[#allocation0]]
  $region61: #{tpu_custom_call.1} parent=0
    _
  %s10 = ssub.s32 1, %s8
  %s11 = scalar_select 0, %s10, %s8
  $region1: #{tpu_custom_call.1} parent=0
    #allocation2 [shape = 'u8[8192]{0}', space=vmem, size = 0x2000, scoped, tag = 'output window, operand 0']
    #allocation3 [shape = 's32[2]{0}', space=sflag, size = 0x8, scoped, tag = 'scoped memory for tpu_custom_call.1']
    %12 = vsyncpa [#allocation3], 0
    %s13 = scalar_lea.sflag [#allocation3], 1
    %14 = vsyncpa %s13, 0
    loop: start=0, step=1, limit=6
    $region2: #{tpu_custom_call.1} parent=1 // loop_pre_header
      _
    $region3: #{tpu_custom_call.1} parent=1 // loop_header
      %s16 = sphi 0, %s20
      %p17 = scmp.ge.s32.totalorder %s16, 6
      %s26 = sphi 0, %s28
      %s29 = sphi 0, %s26
      %s30 = sphi 0, %s29
      %s46 = sphi 0, %s30
      %s50 = sphi 0, %s50
      %s52 = sphi 0, %s50
      %s53 = sphi 0, %s52
      %s67 = sphi 0, %s53
      %s71 = sphi 0, %s71
      %s73 = sphi 0, %s71
      %s74 = sphi 0, %s73
      %s88 = sphi 0, %s74
      %s92 = sphi 0, %s92
      %s94 = sphi 0, %s92
      %s95 = sphi 0, %s94
      %s109 = sphi 0, %s95
      %s113 = sphi 0, %s113
      %s115 = sphi 0, %s113
      %s116 = sphi 0, %s115
      %s130 = sphi 0, %s116
      %s134 = sphi 0, %s134
      %s136 = sphi 0, %s134
      %s137 = sphi 0, %s136
      %s151 = sphi 0, %s137
      %s155 = sphi 0, %s155
      %s157 = sphi 0, %s155
      %s158 = sphi 0, %s157
      %s172 = sphi 0, %s158
      %s178 = sphi 0, %s180
      %s181 = sphi 0, %s178
      %s182 = sphi 0, %s181
      %s198 = sphi 0, %s182
    $region4: #{tpu_custom_call.1} parent=1 // loop_header_branch
      %19 = sbr.rel (%p17) target = $region8
    $region5: #{tpu_custom_call.1} parent=1 // loop_body
      %s21 = ssub.s32 %s16, 1
      %s22 = ssub.s32 %s16, 2
      %s23 = sadd.s32 %s16, 1
      %s24 = ssub.s32 %s16, %s23
      %p25 = scmp.eq.s32.totalorder %s24, 0
      %s27 = sadd.s32 %s26, 1
      %s28 = scalar_select %p25, %s26, %s27
      %p31 = pneg %p25
      %p32 = scmp.eq.s32.totalorder %s16, 3
      %p33 = por %p31, %p32
      %p34 = scmp.ne.s32.totalorder %s26, %s29
      %p35 = scmp.eq.s32.totalorder %s16, 0
      %p36 = por %p34, %p35
      %p37 = scmp.ne.s32.totalorder %s26, %s29
      %p38 = scmp.eq.s32.totalorder %s21, 3
      %p39 = por %p37, %p38
      %p40 = scmp.ne.s32.totalorder %s29, %s30
      %p41 = scmp.eq.s32.totalorder %s21, 0
      %p42 = por %p40, %p41
      %p43 = scmp.ne.s32.totalorder %s29, %s30
      %p44 = scmp.eq.s32.totalorder %s22, 3
      %p45 = por %p43, %p44
      %p47 = scmp.ne.s32.totalorder %s30, %s46
      %p48 = scmp.eq.s32.totalorder %s22, 0
      %p49 = por %p47, %p48
      %s51 = sadd.s32 %s50, 1
      %p54 = scmp.eq.s32.totalorder %s16, 3
      %p55 = scmp.ne.s32.totalorder %s50, %s52
      %p56 = scmp.eq.s32.totalorder %s16, 0
      %p57 = por %p55, %p56
      %p58 = scmp.ne.s32.totalorder %s50, %s52
      %p59 = scmp.eq.s32.totalorder %s21, 3
      %p60 = por %p58, %p59
      %p61 = scmp.ne.s32.totalorder %s52, %s53
      %p62 = scmp.eq.s32.totalorder %s21, 0
      %p63 = por %p61, %p62
      %p64 = scmp.ne.s32.totalorder %s52, %s53
      %p65 = scmp.eq.s32.totalorder %s22, 3
      %p66 = por %p64, %p65
      %p68 = scmp.ne.s32.totalorder %s53, %s67
      %p69 = scmp.eq.s32.totalorder %s22, 0
      %p70 = por %p68, %p69
      %s72 = sadd.s32 %s71, 1
      %p75 = scmp.eq.s32.totalorder %s16, 3
      %p76 = scmp.ne.s32.totalorder %s71, %s73
      %p77 = scmp.eq.s32.totalorder %s16, 0
      %p78 = por %p76, %p77
      %p79 = scmp.ne.s32.totalorder %s71, %s73
      %p80 = scmp.eq.s32.totalorder %s21, 3
      %p81 = por %p79, %p80
      %p82 = scmp.ne.s32.totalorder %s73, %s74
      %p83 = scmp.eq.s32.totalorder %s21, 0
      %p84 = por %p82, %p83
      %p85 = scmp.ne.s32.totalorder %s73, %s74
      %p86 = scmp.eq.s32.totalorder %s22, 3
      %p87 = por %p85, %p86
      %p89 = scmp.ne.s32.totalorder %s74, %s88
      %p90 = scmp.eq.s32.totalorder %s22, 0
      %p91 = por %p89, %p90
      %s93 = sadd.s32 %s92, 1
      %p96 = scmp.eq.s32.totalorder %s16, 3
      %p97 = scmp.ne.s32.totalorder %s92, %s94
      %p98 = scmp.eq.s32.totalorder %s16, 0
      %p99 = por %p97, %p98
      %p100 = scmp.ne.s32.totalorder %s92, %s94
      %p101 = scmp.eq.s32.totalorder %s21, 3
      %p102 = por %p100, %p101
      %p103 = scmp.ne.s32.totalorder %s94, %s95
      %p104 = scmp.eq.s32.totalorder %s21, 0
      %p105 = por %p103, %p104
      %p106 = scmp.ne.s32.totalorder %s94, %s95
      %p107 = scmp.eq.s32.totalorder %s22, 3
      %p108 = por %p106, %p107
      %p110 = scmp.ne.s32.totalorder %s95, %s109
      %p111 = scmp.eq.s32.totalorder %s22, 0
      %p112 = por %p110, %p111
      %s114 = sadd.s32 %s113, 1
      %p117 = scmp.eq.s32.totalorder %s16, 3
      %p118 = scmp.ne.s32.totalorder %s113, %s115
      %p119 = scmp.eq.s32.totalorder %s16, 0
      %p120 = por %p118, %p119
      %p121 = scmp.ne.s32.totalorder %s113, %s115
      %p122 = scmp.eq.s32.totalorder %s21, 3
      %p123 = por %p121, %p122
      %p124 = scmp.ne.s32.totalorder %s115, %s116
      %p125 = scmp.eq.s32.totalorder %s21, 0
      %p126 = por %p124, %p125
      %p127 = scmp.ne.s32.totalorder %s115, %s116
      %p128 = scmp.eq.s32.totalorder %s22, 3
      %p129 = por %p127, %p128
      %p131 = scmp.ne.s32.totalorder %s116, %s130
      %p132 = scmp.eq.s32.totalorder %s22, 0
      %p133 = por %p131, %p132
      %s135 = sadd.s32 %s134, 1
      %p138 = scmp.eq.s32.totalorder %s16, 3
      %p139 = scmp.ne.s32.totalorder %s134, %s136
      %p140 = scmp.eq.s32.totalorder %s16, 0
      %p141 = por %p139, %p140
      %p142 = scmp.ne.s32.totalorder %s134, %s136
      %p143 = scmp.eq.s32.totalorder %s21, 3
      %p144 = por %p142, %p143
      %p145 = scmp.ne.s32.totalorder %s136, %s137
      %p146 = scmp.eq.s32.totalorder %s21, 0
      %p147 = por %p145, %p146
      %p148 = scmp.ne.s32.totalorder %s136, %s137
      %p149 = scmp.eq.s32.totalorder %s22, 3
      %p150 = por %p148, %p149
      %p152 = scmp.ne.s32.totalorder %s137, %s151
      %p153 = scmp.eq.s32.totalorder %s22, 0
      %p154 = por %p152, %p153
      %s156 = sadd.s32 %s155, 1
      %p159 = scmp.eq.s32.totalorder %s16, 3
      %p160 = scmp.ne.s32.totalorder %s155, %s157
      %p161 = scmp.eq.s32.totalorder %s16, 0
      %p162 = por %p160, %p161
      %p163 = scmp.ne.s32.totalorder %s155, %s157
      %p164 = scmp.eq.s32.totalorder %s21, 3
      %p165 = por %p163, %p164
      %p166 = scmp.ne.s32.totalorder %s157, %s158
      %p167 = scmp.eq.s32.totalorder %s21, 0
      %p168 = por %p166, %p167
      %p169 = scmp.ne.s32.totalorder %s157, %s158
      %p170 = scmp.eq.s32.totalorder %s22, 3
      %p171 = por %p169, %p170
      %p173 = scmp.ne.s32.totalorder %s158, %s172
      %p174 = scmp.eq.s32.totalorder %s22, 0
      %p175 = por %p173, %p174
      %s176 = ssub.s32 %s16, %s23
      %p177 = scmp.eq.s32.totalorder %s176, 0
      %s179 = sadd.s32 %s178, 1
      %s180 = scalar_select %p177, %s178, %s179
      %p183 = pneg %p177
      %p184 = scmp.eq.s32.totalorder %s16, 3
      %p185 = por %p183, %p184
      %p186 = scmp.ne.s32.totalorder %s178, %s181
      %p187 = scmp.eq.s32.totalorder %s16, 0
      %p188 = por %p186, %p187
      %p189 = scmp.ne.s32.totalorder %s178, %s181
      %p190 = scmp.eq.s32.totalorder %s21, 3
      %p191 = por %p189, %p190
      %p192 = scmp.ne.s32.totalorder %s181, %s182
      %p193 = scmp.eq.s32.totalorder %s21, 0
      %p194 = por %p192, %p193
      %p195 = scmp.ne.s32.totalorder %s181, %s182
      %p196 = scmp.eq.s32.totalorder %s22, 3
      %p197 = por %p195, %p196
      %p199 = scmp.ne.s32.totalorder %s182, %s198
      %p200 = scmp.eq.s32.totalorder %s22, 0
      %p201 = por %p199, %p200
      %p202 = scmp.le.s32.totalorder 1, %s16
      %p203 = scmp.lt.s32.totalorder %s16, 5
      %p204 = pnand %p202, %p203
      %p205 = pneg %p204
      // Predicated region
      $region9: #{tpu_custom_call.1} parent=5 // pred_check
        _
      $region10: #{tpu_custom_call.1} parent=5 // pred_check_branch
        %207 = sbr.rel (%p204) target = $region12
      $region11: #{tpu_custom_call.1} parent=5 // pred_region
        %s208 = ssub.s32 %s16, 1
        // Predicated region
        $region13: #{tpu_custom_call.1} parent=11 // pred_check
          %p209 = pneg %p63
        $region14: #{tpu_custom_call.1} parent=11 // pred_check_branch
          %211 = sbr.rel (%p209) target = $region16
        $region15: #{tpu_custom_call.1} parent=11 // pred_region
          _
        $region16: #{tpu_custom_call.1} parent=11 // pred_fallthru
          _
        // Predicated region
        $region17: #{tpu_custom_call.1} parent=11 // pred_check
          %p212 = pneg %p84
        $region18: #{tpu_custom_call.1} parent=11 // pred_check_branch
          %214 = sbr.rel (%p212) target = $region20
        $region19: #{tpu_custom_call.1} parent=11 // pred_region
          _
        $region20: #{tpu_custom_call.1} parent=11 // pred_fallthru
          _
        // Predicated region
        $region21: #{tpu_custom_call.1} parent=11 // pred_check
          %p215 = pneg %p105
        $region22: #{tpu_custom_call.1} parent=11 // pred_check_branch
          %217 = sbr.rel (%p215) target = $region24
        $region23: #{tpu_custom_call.1} parent=11 // pred_region
          _
        $region24: #{tpu_custom_call.1} parent=11 // pred_fallthru
          _
        // Predicated region
        $region25: #{tpu_custom_call.1} parent=11 // pred_check
          %p218 = pneg %p126
        $region26: #{tpu_custom_call.1} parent=11 // pred_check_branch
          %220 = sbr.rel (%p218) target = $region28
        $region27: #{tpu_custom_call.1} parent=11 // pred_region
          _
        $region28: #{tpu_custom_call.1} parent=11 // pred_fallthru
          _
        // Predicated region
        $region29: #{tpu_custom_call.1} parent=11 // pred_check
          %p221 = pneg %p147
        $region30: #{tpu_custom_call.1} parent=11 // pred_check_branch
          %223 = sbr.rel (%p221) target = $region32
        $region31: #{tpu_custom_call.1} parent=11 // pred_region
          _
        $region32: #{tpu_custom_call.1} parent=11 // pred_fallthru
          _
        // Predicated region
        $region33: #{tpu_custom_call.1} parent=11 // pred_check
          %p224 = pneg %p168
        $region34: #{tpu_custom_call.1} parent=11 // pred_check_branch
          %226 = sbr.rel (%p224) target = $region36
        $region35: #{tpu_custom_call.1} parent=11 // pred_region
          _
        $region36: #{tpu_custom_call.1} parent=11 // pred_fallthru
          _
      $region12: #{tpu_custom_call.1} parent=5 // pred_fallthru
        _
      %p227 = scmp.lt.s32.totalorder %s16, 4
      // Predicated region
      $region37: #{tpu_custom_call.1} parent=5 // pred_check
        %p228 = pneg %p227
      $region38: #{tpu_custom_call.1} parent=5 // pred_check_branch
        %230 = sbr.rel (%p228) target = $region40
      $region39: #{tpu_custom_call.1} parent=5 // pred_region
        // Predicated region
        $region41: #{tpu_custom_call.1} parent=39 // pred_check
          %p231 = pneg %p36
        $region42: #{tpu_custom_call.1} parent=39 // pred_check_branch
          %233 = sbr.rel (%p231) target = $region44
        $region43: #{tpu_custom_call.1} parent=39 // pred_region
          %s234 = smul.u32 2, %s16
          %p235 = scmp.lt.s32.totalorder %s234, 7
          %s236 = scalar_select %p235, %s234, 7
          %s237 = smul.addr %s236, 4
          %s238 = scalar_lea.vmem %s0, %s237
          %s239 = smul.u32 2, %s16
        $region44: #{tpu_custom_call.1} parent=39 // pred_fallthru
          _
      $region40: #{tpu_custom_call.1} parent=5 // pred_fallthru
        _
      %p240 = scmp.le.s32.totalorder 1, %s16
      %p241 = scmp.lt.s32.totalorder %s16, 5
      %p242 = pnand %p240, %p241
      %p243 = pneg %p242
      // Predicated region
      $region45: #{tpu_custom_call.1} parent=5 // pred_check
        _
      $region46: #{tpu_custom_call.1} parent=5 // pred_check_branch
        %245 = sbr.rel (%p242) target = $region48
      $region47: #{tpu_custom_call.1} parent=5 // pred_region
        %s246 = ssub.s32 %s16, 1
        %s247 = smul.u32 2, %s21
        %p248 = scmp.lt.s32.totalorder %s247, 7
        %s249 = scalar_select %p248, %s247, 7
        %s250 = smul.addr %s249, 4
        %s251 = scalar_lea.vmem %s0, %s250
        %p252 = pneg %p42
        %p253 = pneg %p39
        %p254 = pneg %p63
        %p255 = pneg %p60
        %p256 = pneg %p84
        %p257 = pneg %p81
        %p258 = pneg %p105
        %p259 = pneg %p102
        %p260 = pneg %p126
        %p261 = pneg %p123
        %p262 = pneg %p147
        %p263 = pneg %p144
        %p264 = pneg %p168
        %p265 = pneg %p165
        %p266 = pneg %p194
        %p267 = pneg %p191
        %s268 = sand.u32 %s181, 1
        %s269 = scalar_lea.sflag [#allocation3], %s268
        %s270 = sand.u32 %s181, 1
        %s271 = smul.addr %s270, 8
        %s272 = scalar_lea.vmem [#allocation2], %s271
        %s273 = smul.u32 2, %s21
        %p274 = scmp.lt.s32.totalorder %s273, 7
        %s275 = scalar_select %p274, %s273, 7
        %s276 = smul.addr %s275, 4
        %s277 = scalar_lea.vmem %s0, %s276
        %s278 = smul.u32 2, %s21
        %s279 = smul.u32 2, %s21
        %v280 = vld [vmem:[%s277] sm:$0xff]
        %v281 = vld [vmem:[%s1] sm:$0xff]
        %v282 = vld [vmem:[%s2] sm:$0xff]
        %284 = vset.pattern.permute.xlu0 0
        %285 = vperm.xlu0 %284, %v282
        %v286 = vpop.permute.xlu0 %285
        %v289 = vcombine.high %v280, %v280
        %vm290 = vcmask 31744
        %v292 = vsel %vm290, %v281, 0
        %vm294 = vcmask 1043456
        %v295 = vsel %vm294, %v280, 0
        %v297 = vsel %vm294, %v289, 0
        %299 = vmatprep.subr.mxu0 %v297
        %300 = vmatpush1.msra.mxu0 %v295
        %301 = vmatprep.subr.mxu0 0.0
        %302 = vmatpush1.msra.mxu0 0.0
        %303 = vmatprep.subr.mxu0 0.0
        %304 = vmatpush1.msra.mxu0 0.0
        %305 = vmatprep.subr.mxu0 0.0
        %306 = vmatpush1.msra.mxu0 0.0
        %307 = vmatprep.subr.mxu0 0.0
        %308 = vmatpush1.msra.mxu0 0.0
        %309 = vmatprep.subr.mxu0 0.0
        %310 = vmatpush1.msra.mxu0 0.0
        %311 = vmatprep.subr.mxu0 0.0
        %312 = vmatpush1.msra.mxu0 0.0
        %313 = vmatprep.subr.mxu0 0.0
        %314 = vmatpush1.msra.mxu0 0.0
        %315 = vmatprep.subr.mxu0 0.0
        %316 = vmatpush1.msra.mxu0 0.0
        %317 = vmatprep.subr.mxu0 0.0
        %318 = vmatpush1.msra.mxu0 0.0
        %319 = vmatprep.subr.mxu0 0.0
        %320 = vmatpush1.msra.mxu0 0.0
        %321 = vmatprep.subr.mxu0 0.0
        %322 = vmatpush1.msra.mxu0 0.0
        %323 = vmatprep.subr.mxu0 0.0
        %324 = vmatpush1.msra.mxu0 0.0
        %325 = vmatprep.subr.mxu0 0.0
        %326 = vmatpush1.msra.mxu0 0.0
        %327 = vmatprep.subr.mxu0 0.0
        %328 = vmatpush1.msra.mxu0 0.0
        %329 = vmatprep.subr.mxu0 0.0
        %330 = vmatpush1.msra.mxu0 0.0
        %331 = vmatprep.subr.mxu0 0.0
        %332 = vmatpush1.msra.mxu0 0.0
        %333 = vmatprep.subr.mxu0 0.0
        %334 = vmatpush1.msra.mxu0 0.0
        %335 = vmatprep.subr.mxu0 0.0
        %336 = vmatpush1.msra.mxu0 0.0
        %337 = vmatprep.subr.mxu0 0.0
        %338 = vmatpush1.msra.mxu0 0.0
        %339 = vmatprep.subr.mxu0 0.0
        %340 = vmatpush1.msra.mxu0 0.0
        %341 = vmatprep.subr.mxu0 0.0
        %342 = vmatpush1.msra.mxu0 0.0
        %343 = vmatprep.subr.mxu0 0.0
        %344 = vmatpush1.msra.mxu0 0.0
        %345 = vmatprep.subr.mxu0 0.0
        %346 = vmatpush1.msra.mxu0 0.0
        %347 = vmatprep.subr.mxu0 0.0
        %348 = vmatpush1.msra.mxu0 0.0
        %349 = vmatprep.subr.mxu0 0.0
        %350 = vmatpush1.msra.mxu0 0.0
        %351 = vmatprep.subr.mxu0 0.0
        %352 = vmatpush1.msra.mxu0 0.0
        %353 = vmatprep.subr.mxu0 0.0
        %354 = vmatpush1.msra.mxu0 0.0
        %355 = vmatprep.subr.mxu0 0.0
        %356 = vmatpush1.msra.mxu0 0.0
        %357 = vmatprep.subr.mxu0 0.0
        %358 = vmatpush1.msra.mxu0 0.0
        %359 = vmatprep.subr.mxu0 0.0
        %360 = vmatpush1.msra.mxu0 0.0
        %361 = vmatprep.subr.mxu0 0.0
        %362 = vmatpush1.msra.mxu0 0.0
        %363 = vmatprep.mubr.f32.mxu0 0.0
        %364 = vmatmul.mubr.f32.gmra.mrb[0].mxu0 %v292
        %v365 = vpop.f32.mrb[0].mxu0
        %v366 = vadd.f32 %v286, %v365
        %v367 = vpop.f32.mrb[0].mxu0
        %v368 = vadd.f32 %v286, %v367
        %369 = vdwg.mxu0
        %v370 = vmax.f32 %v366, 0.0
        %v371 = vmax.f32 %v368, 0.0
        %v372 = vld [vmem:[%s3] sm:$0xff]
        %v373 = vld [vmem:[%s3 + $0x8] sm:$0x1]
        %v374 = vld [vmem:[%s4] sm:$0xff]
        %v375 = vld [vmem:[%s4 + $0x8] sm:$0x1]
        %377 = vset.pattern.permute.xlu0 0
        %378 = vperm.xlu0 %377, %v374
        %v379 = vpop.permute.xlu0 %378
        %382 = vset.pattern.permute.xlu0 0
        %383 = vperm.xlu0 %382, %v375
        %v384 = vpop.permute.xlu0 %383
        %vm386 = vcmask 64512
        %v388 = vsel %vm386, %v372, 0
        %v391 = vsel %vm386, %v373, 0
        %393 = vmatprep.subr.mxu0 %v371
        %394 = vmatpush1.msra.mxu0 %v370
        %395 = vmatprep.subr.mxu0 0.0
        %396 = vmatpush1.msra.mxu0 0.0
        %397 = vmatprep.subr.mxu0 0.0
        %398 = vmatpush1.msra.mxu0 0.0
        %399 = vmatprep.subr.mxu0 0.0
        %400 = vmatpush1.msra.mxu0 0.0
        %401 = vmatprep.subr.mxu0 0.0
        %402 = vmatpush1.msra.mxu0 0.0
        %403 = vmatprep.subr.mxu0 0.0
        %404 = vmatpush1.msra.mxu0 0.0
        %405 = vmatprep.subr.mxu0 0.0
        %406 = vmatpush1.msra.mxu0 0.0
        %407 = vmatprep.subr.mxu0 0.0
        %408 = vmatpush1.msra.mxu0 0.0
        %409 = vmatprep.subr.mxu0 0.0
        %410 = vmatpush1.msra.mxu0 0.0
        %411 = vmatprep.subr.mxu0 0.0
        %412 = vmatpush1.msra.mxu0 0.0
        %413 = vmatprep.subr.mxu0 0.0
        %414 = vmatpush1.msra.mxu0 0.0
        %415 = vmatprep.subr.mxu0 0.0
        %416 = vmatpush1.msra.mxu0 0.0
        %417 = vmatprep.subr.mxu0 0.0
        %418 = vmatpush1.msra.mxu0 0.0
        %419 = vmatprep.subr.mxu0 0.0
        %420 = vmatpush1.msra.mxu0 0.0
        %421 = vmatprep.subr.mxu0 0.0
        %422 = vmatpush1.msra.mxu0 0.0
        %423 = vmatprep.subr.mxu0 0.0
        %424 = vmatpush1.msra.mxu0 0.0
        %425 = vmatprep.subr.mxu0 0.0
        %426 = vmatpush1.msra.mxu0 0.0
        %427 = vmatprep.subr.mxu0 0.0
        %428 = vmatpush1.msra.mxu0 0.0
        %429 = vmatprep.subr.mxu0 0.0
        %430 = vmatpush1.msra.mxu0 0.0
        %431 = vmatprep.subr.mxu0 0.0
        %432 = vmatpush1.msra.mxu0 0.0
        %433 = vmatprep.subr.mxu0 0.0
        %434 = vmatpush1.msra.mxu0 0.0
        %435 = vmatprep.subr.mxu0 0.0
        %436 = vmatpush1.msra.mxu0 0.0
        %437 = vmatprep.subr.mxu0 0.0
        %438 = vmatpush1.msra.mxu0 0.0
        %439 = vmatprep.subr.mxu0 0.0
        %440 = vmatpush1.msra.mxu0 0.0
        %441 = vmatprep.subr.mxu0 0.0
        %442 = vmatpush1.msra.mxu0 0.0
        %443 = vmatprep.subr.mxu0 0.0
        %444 = vmatpush1.msra.mxu0 0.0
        %445 = vmatprep.subr.mxu0 0.0
        %446 = vmatpush1.msra.mxu0 0.0
        %447 = vmatprep.subr.mxu0 0.0
        %448 = vmatpush1.msra.mxu0 0.0
        %449 = vmatprep.subr.mxu0 0.0
        %450 = vmatpush1.msra.mxu0 0.0
        %451 = vmatprep.subr.mxu0 0.0
        %452 = vmatpush1.msra.mxu0 0.0
        %453 = vmatprep.subr.mxu0 0.0
        %454 = vmatpush1.msra.mxu0 0.0
        %455 = vmatprep.subr.mxu0 0.0
        %456 = vmatpush1.msra.mxu0 0.0
        %457 = vmatprep.mubr.f32.mxu0 0.0
        %458 = vmatmul.mubr.f32.gmra.mrb[0].mxu0 %v388
        %v459 = vpop.f32.mrb[0].mxu0
        %v460 = vadd.f32 %v379, %v459
        %v461 = vpop.f32.mrb[0].mxu0
        %v462 = vadd.f32 %v379, %v461
        %463 = vmatprep.mubr.f32.mxu0 0.0
        %464 = vmatmul.mubr.f32.gmra.mrb[0].mxu0 %v391
        %v465 = vpop.f32.mrb[0].mxu0
        %v466 = vadd.f32 %v384, %v465
        %v467 = vpop.f32.mrb[0].mxu0
        %v468 = vadd.f32 %v384, %v467
        %469 = vdwg.mxu0
        %v470 = vmax.f32 %v460, 0.0
        %v471 = vmax.f32 %v462, 0.0
        %v472 = vmax.f32 %v466, 0.0
        %v473 = vmax.f32 %v468, 0.0
        %v474 = vld [vmem:[%s5] sm:$0x7]
        %v475 = vld [vmem:[%s6] sm:$0x7]
        %477 = vset.pattern.permute.xlu0 0
        %478 = vperm.xlu0 %477, %v475
        %v479 = vpop.permute.xlu0 %478
        %vm481 = vcmask 72704
        %v483 = vsel %vm481, %v474, 0
        %vm485 = vcmask 1040384
        %v487 = vsel %vm485, %v472, 0
        %v490 = vsel %vm485, %v473, 0
        %492 = vmatprep.subr.mxu0 %v471
        %493 = vmatpush1.msra.mxu0 %v470
        %494 = vmatprep.subr.mxu0 %v490
        %495 = vmatpush1.msra.mxu0 %v487
        %496 = vmatprep.subr.mxu0 0.0
        %497 = vmatpush1.msra.mxu0 0.0
        %498 = vmatprep.subr.mxu0 0.0
        %499 = vmatpush1.msra.mxu0 0.0
        %500 = vmatprep.subr.mxu0 0.0
        %501 = vmatpush1.msra.mxu0 0.0
        %502 = vmatprep.subr.mxu0 0.0
        %503 = vmatpush1.msra.mxu0 0.0
        %504 = vmatprep.subr.mxu0 0.0
        %505 = vmatpush1.msra.mxu0 0.0
        %506 = vmatprep.subr.mxu0 0.0
        %507 = vmatpush1.msra.mxu0 0.0
        %508 = vmatprep.subr.mxu0 0.0
        %509 = vmatpush1.msra.mxu0 0.0
        %510 = vmatprep.subr.mxu0 0.0
        %511 = vmatpush1.msra.mxu0 0.0
        %512 = vmatprep.subr.mxu0 0.0
        %513 = vmatpush1.msra.mxu0 0.0
        %514 = vmatprep.subr.mxu0 0.0
        %515 = vmatpush1.msra.mxu0 0.0
        %516 = vmatprep.subr.mxu0 0.0
        %517 = vmatpush1.msra.mxu0 0.0
        %518 = vmatprep.subr.mxu0 0.0
        %519 = vmatpush1.msra.mxu0 0.0
        %520 = vmatprep.subr.mxu0 0.0
        %521 = vmatpush1.msra.mxu0 0.0
        %522 = vmatprep.subr.mxu0 0.0
        %523 = vmatpush1.msra.mxu0 0.0
        %524 = vmatprep.subr.mxu0 0.0
        %525 = vmatpush1.msra.mxu0 0.0
        %526 = vmatprep.subr.mxu0 0.0
        %527 = vmatpush1.msra.mxu0 0.0
        %528 = vmatprep.subr.mxu0 0.0
        %529 = vmatpush1.msra.mxu0 0.0
        %530 = vmatprep.subr.mxu0 0.0
        %531 = vmatpush1.msra.mxu0 0.0
        %532 = vmatprep.subr.mxu0 0.0
        %533 = vmatpush1.msra.mxu0 0.0
        %534 = vmatprep.subr.mxu0 0.0
        %535 = vmatpush1.msra.mxu0 0.0
        %536 = vmatprep.subr.mxu0 0.0
        %537 = vmatpush1.msra.mxu0 0.0
        %538 = vmatprep.subr.mxu0 0.0
        %539 = vmatpush1.msra.mxu0 0.0
        %540 = vmatprep.subr.mxu0 0.0
        %541 = vmatpush1.msra.mxu0 0.0
        %542 = vmatprep.subr.mxu0 0.0
        %543 = vmatpush1.msra.mxu0 0.0
        %544 = vmatprep.subr.mxu0 0.0
        %545 = vmatpush1.msra.mxu0 0.0
        %546 = vmatprep.subr.mxu0 0.0
        %547 = vmatpush1.msra.mxu0 0.0
        %548 = vmatprep.subr.mxu0 0.0
        %549 = vmatpush1.msra.mxu0 0.0
        %550 = vmatprep.subr.mxu0 0.0
        %551 = vmatpush1.msra.mxu0 0.0
        %552 = vmatprep.subr.mxu0 0.0
        %553 = vmatpush1.msra.mxu0 0.0
        %554 = vmatprep.subr.mxu0 0.0
        %555 = vmatpush1.msra.mxu0 0.0
        %556 = vmatprep.mubr.f32.mxu0 0.0
        %557 = vmatmul.mubr.f32.gmra.mrb[0].mxu0 %v483
        %v558 = vpop.f32.mrb[0].mxu0
        %v559 = vadd.f32 %v479, %v558
        %v560 = vpop.f32.mrb[0].mxu0
        %v561 = vadd.f32 %v479, %v560
        %562 = vdwg.mxu0
        %v565 = vcombine.low %v559, %v561
        %567 = vst [vmem:[%s272] sm:$0x77] %v565
        %s568 = sand.u32 %s181, 1
        %s569 = scalar_lea.sflag [#allocation3], %s568
        %s570 = sand.u32 %s181, 1
        %s571 = smul.addr %s570, 8
        %s572 = scalar_lea.vmem [#allocation2], %s571
        // Predicated region
        $region49: #{tpu_custom_call.1} parent=47 // pred_check
          %p573 = pneg %p191
        $region50: #{tpu_custom_call.1} parent=47 // pred_check_branch
          %575 = sbr.rel (%p573) target = $region52
        $region51: #{tpu_custom_call.1} parent=47 // pred_region
          %s576 = smul.u32 2, %s21
          %s578 = ssub.s32 128, 128
          %579 = vsyncadd %s569, %s578
          %s580 = smul.addr %s576, 64
          %s581 = scalar_lea.hbm %s7, %s580
          %s583 = sshll.u32 %s572, 4
          %s584 = int_to_ptr.vmem [resolvable:$true] %s583
          %586 = dma.vmem_to_hbm [thread:$0]  %s584, 128, %s581, %s569
        $region52: #{tpu_custom_call.1} parent=47 // pred_fallthru
          _
      $region48: #{tpu_custom_call.1} parent=5 // pred_fallthru
        _
      %p587 = scmp.le.s32.totalorder 2, %s16
      // Predicated region
      $region53: #{tpu_custom_call.1} parent=5 // pred_check
        %p588 = pneg %p587
      $region54: #{tpu_custom_call.1} parent=5 // pred_check_branch
        %590 = sbr.rel (%p588) target = $region56
      $region55: #{tpu_custom_call.1} parent=5 // pred_region
        %s591 = ssub.s32 %s16, 2
        // Predicated region
        $region57: #{tpu_custom_call.1} parent=55 // pred_check
          %p592 = pneg %p197
        $region58: #{tpu_custom_call.1} parent=55 // pred_check_branch
          %594 = sbr.rel (%p592) target = $region60
        $region59: #{tpu_custom_call.1} parent=55 // pred_region
          %s595 = sand.u32 %s182, 1
          %s596 = scalar_lea.sflag [#allocation3], %s595
          %s597 = sand.u32 %s182, 1
          %s598 = smul.addr %s597, 8
          %s599 = scalar_lea.vmem [#allocation2], %s598
          %600 = dma.done %s596, 128
        $region60: #{tpu_custom_call.1} parent=55 // pred_fallthru
          _
      $region56: #{tpu_custom_call.1} parent=5 // pred_fallthru
        _
    $region6: #{tpu_custom_call.1} parent=1 // loop_footer
      %s20 = sadd.s32 1, %s16
    $region7: #{tpu_custom_call.1} parent=1 // loop_footer_branch
      %15 = sbr.rel target = $region3
    $region8: #{tpu_custom_call.1} parent=1 // loop_exit
      _
    %601 = vsyncpa [#allocation3], 1
    %s602 = scalar_lea.sflag [#allocation3], 1
    %603 = vsyncpa %s602, 1

</llo_original>
